<compile_context>
chip_gen: v7x
topology: tpu7x:2x2x1
jax: 0.10.0
libtpu: 0.0.40
codegen_flags: <defaults>
</compile_context>

<pallas_src>
import jax
import jax.numpy as jnp
from jax import lax
from jax.experimental import pallas as pl
from jax.experimental.pallas import tpu as pltpu

_EPS = 1e-12  # matches torch.nn.functional.normalize default eps


def _cdiv(a: int, b: int) -> int:
    return (a + b - 1) // b


def _vmem_capacity_bytes() -> int:
    """Per-core VMEM capacity; conservative fallback if the query fails."""
    try:
        cap = int(pltpu.get_tpu_info().vmem_capacity_bytes)
        if cap > 0:
            return cap
    except Exception:
        pass
    return 64 << 20  # v7x per-TC VMEM (smallest across generations)


# ----------------------------------------------------------------------------
# Kernel 1a: row-wise L2 normalization, natural layout (used for x).
# ----------------------------------------------------------------------------
def _row_normalize_kernel(v_ref, o_ref):
    v = v_ref[...].astype(jnp.float32)
    sumsq = jnp.sum(v * v, axis=-1, keepdims=True)
    # v * rsqrt(max(sumsq, eps^2)) == v / max(||v||, eps)  (F.normalize semantics)
    inv = lax.rsqrt(jnp.maximum(sumsq, _EPS * _EPS))
    o_ref[...] = (v * inv).astype(o_ref.dtype)


# ----------------------------------------------------------------------------
# Kernel 1b: row-wise L2 normalization + transpose (used for weight -> (D, C)).
# One-time XLU transpose here keeps the GEMM RHS in natural (K, N) layout.
# ----------------------------------------------------------------------------
def _row_normalize_t_kernel(v_ref, ot_ref):
    v = v_ref[...].astype(jnp.float32)                       # (tr, D)
    sumsq = jnp.sum(v * v, axis=-1, keepdims=True)
    inv = lax.rsqrt(jnp.maximum(sumsq, _EPS * _EPS))
    ot_ref[...] = (v * inv).T.astype(ot_ref.dtype)           # (D, tr)


def _row_normalize(x, *, out_dtype):
    """L2-normalize rows of x (B, D) -> (B, D) in out_dtype."""
    B, D = x.shape
    budget = 8 << 20  # in f32 + out (<=f32), double-buffered, + temps
    tr = budget // (14 * max(D, 1))
    tr = max(8, min((tr // 8) * 8, 2048))
    tr = B if B <= tr else tr
    return pl.pallas_call(
        _row_normalize_kernel,
        out_shape=jax.ShapeDtypeStruct((B, D), out_dtype),
        grid_spec=pltpu.PrefetchScalarGridSpec(
            num_scalar_prefetch=0,
            grid=(_cdiv(B, tr),),
            in_specs=[pl.BlockSpec((tr, D), lambda i: (i, 0))],
            out_specs=pl.BlockSpec((tr, D), lambda i: (i, 0)),
        ),
        compiler_params=pltpu.CompilerParams(dimension_semantics=("parallel",)),
    )(x)


def _row_normalize_transposed(w, *, out_dtype):
    """L2-normalize rows of w (C, D) and emit transposed (D, C) in out_dtype."""
    C, D = w.shape
    budget = 8 << 20
    tr = budget // (16 * max(D, 1))
    # tr is the lane dim of the transposed output block -> multiple of 128
    # (or the full class dim if everything fits in one block).
    tr = max(128, min((tr // 128) * 128, 1024))
    tr = C if C <= tr else tr
    return pl.pallas_call(
        _row_normalize_t_kernel,
        out_shape=jax.ShapeDtypeStruct((D, C), out_dtype),
        grid_spec=pltpu.PrefetchScalarGridSpec(
            num_scalar_prefetch=0,
            grid=(_cdiv(C, tr),),
            in_specs=[pl.BlockSpec((tr, D), lambda i: (i, 0))],
            out_specs=pl.BlockSpec((D, tr), lambda i: (0, i)),
        ),
        compiler_params=pltpu.CompilerParams(dimension_semantics=("parallel",)),
    )(w)


# ----------------------------------------------------------------------------
# Kernel 2: pure MXU matmul on pre-normalized bf16 operands, f32 accumulation.
# ----------------------------------------------------------------------------
def _cosine_matmul_kernel(xn_ref, wnt_ref, o_ref):
    o_ref[...] = jnp.dot(
        xn_ref[...], wnt_ref[...], preferred_element_type=jnp.float32
    ).astype(o_ref.dtype)


def _pick_class_tile(C: int) -> int:
    """Lane-dense class tile (multiple of 128) minimizing ragged waste."""
    if C <= 512:
        return C  # single full-dim block (legal even if not a 128 multiple)
    best_tc, best_cov = 128, _cdiv(C, 128) * 128
    for cand in (512, 384, 256):
        cov = _cdiv(C, cand) * cand
        if cov < best_cov:
            best_tc, best_cov = cand, cov
    return best_tc


# ----------------------------------------------------------------------------
# Wrapper: penalty-free forward of BaseMarginProduct.
# ----------------------------------------------------------------------------
def base_margin_product_forward(
    x,
    weight,
    t=None,
    is_train=False,
    *,
    tb=None,
    tc=None,
    out_dtype=None,
    operand_dtype=jnp.bfloat16,
):
    """Penalty-free forward of BaseMarginProduct: cosine(x, weight).

    x:      (B, D) float array
    weight: (C, D) float array  (output_dim, input_dim)
    t:      (B,) int labels -- unused in the penalty-free path
    """
    del t          # labels only matter for the (abstract) margin-penalty path
    del is_train   # base class applies no penalty; subclass would branch here

    B, D = x.shape
    C, Dw = weight.shape
    assert D == Dw

    if out_dtype is None:
        out_dtype = x.dtype  # matches the module's float output; pass bf16 to halve writeback
    out_bytes = jnp.dtype(out_dtype).itemsize
    op_bytes = jnp.dtype(operand_dtype).itemsize

    # Normalize both operands exactly once, straight into the MXU-native dtype.
    x_n = _row_normalize(x, out_dtype=operand_dtype)                 # (B, D)
    w_nt = _row_normalize_transposed(weight, out_dtype=operand_dtype)  # (D, C)

    vmem_cap = _vmem_capacity_bytes()
    budget = int(vmem_cap * 0.45)  # double-buffered working-set budget, with headroom

    if tc is None:
        tc = _pick_class_tile(C)
    if tb is None:
        # Grow the batch tile as far as the VMEM budget allows: weight HBM
        # traffic = ceil(B/tb) * C * D * op_bytes, so bigger tb is the win.
        w_stream = 2 * D * tc * op_bytes                         # double-buffered W tiles
        denom = 2 * D * op_bytes + 2 * tc * out_bytes + tc * 4   # x tiles + out tiles + f32 acc
        tb = max((budget - w_stream) // max(denom, 1), 8)
        tb = min(tb, 4096)
        if B <= tb:
            tb = B
        else:
            tb = max((tb // 8) * 8, 8)

    workset = (2 * tb * D * op_bytes + 2 * D * tc * op_bytes
               + 2 * tb * tc * out_bytes + tb * tc * 4)
    vmem_limit = int(min(vmem_cap * 0.9, max(workset * 1.5, 32 << 20)))

    grid = (_cdiv(B, tb), _cdiv(C, tc))

    # Ragged tail blocks (B % tb, C % tc) are handled by Pallas: OOB reads are
    # garbage that only feeds OOB output positions, and OOB writes are masked,
    # so no host-side padding / slicing (and no extra HBM pass) is needed.
    out = pl.pallas_call(
        _cosine_matmul_kernel,
        out_shape=jax.ShapeDtypeStruct((B, C), out_dtype),
        grid_spec=pltpu.PrefetchScalarGridSpec(
            num_scalar_prefetch=0,
            grid=grid,
            in_specs=[
                pl.BlockSpec((tb, D), lambda i, j: (i, 0)),   # batch tile of x_n
                pl.BlockSpec((D, tc), lambda i, j: (0, j)),   # class tile of w_n^T
            ],
            out_specs=pl.BlockSpec((tb, tc), lambda i, j: (i, j)),
        ),
        compiler_params=pltpu.CompilerParams(
            dimension_semantics=("parallel", "parallel"),
            vmem_limit_bytes=vmem_limit,
        ),
    )(x_n, w_nt)

    return out


if __name__ == "__main__":
    key = jax.random.PRNGKey(0)
    kx, kw, kt = jax.random.split(key, 3)

    def ref_cosine(x, w):
        xn = x / jnp.maximum(jnp.linalg.norm(x, axis=1, keepdims=True), _EPS)
        wn = w / jnp.maximum(jnp.linalg.norm(w, axis=1, keepdims=True), _EPS)
        return xn @ wn.T

    # Case 1: small shapes consistent with the module: batch=8, input_dim=32, output_dim=16.
    B, D, C = 8, 32, 16
    x = jax.random.normal(kx, (B, D), dtype=jnp.float32)
    weight = jax.random.normal(kw, (C, D), dtype=jnp.float32) * 0.1
    t = jax.random.randint(kt, (B,), 0, C, dtype=jnp.int32)

    out = base_margin_product_forward(x, weight, t, is_train=False)
    jax.block_until_ready(out)
    ref = ref_cosine(x, weight)
    assert out.shape == (B, C)
    # bf16 operands (f32 accumulation) => ~1e-3 abs error on cosines in [-1, 1].
    assert jnp.allclose(out, ref, atol=2e-2), "mismatch vs reference (small case)"

    # Case 2: exercises ragged class tiles (C not a multiple of the 128-lane tile).
    B2, D2, C2 = 40, 128, 600
    kx2, kw2 = jax.random.split(kx)
    x2 = jax.random.normal(kx2, (B2, D2), dtype=jnp.float32)
    w2 = jax.random.normal(kw2, (C2, D2), dtype=jnp.float32) * 0.05
    out2 = base_margin_product_forward(x2, w2, None, is_train=False)
    jax.block_until_ready(out2)
    ref2 = ref_cosine(x2, w2)
    assert out2.shape == (B2, C2)
    assert jnp.allclose(out2, ref2, atol=2e-2), "mismatch vs reference (ragged case)"

    print("KERNEL_OK")
</pallas_src>

<mosaic_0001>
module attributes {stable_mosaic.version = 11 : i64} {
  func.func @_row_normalize_kernel(%arg0: i32, %arg1: memref<8x32xf32, #tpu.memory_space<vmem>>, %arg2: memref<8x32xbf16, #tpu.memory_space<vmem>>) attributes {dimension_semantics = [#tpu.dimension_semantics<parallel>], iteration_bounds = array<i64: 1>, scalar_prefetch = 0 : i64, scratch_operands = 0 : i64, tpu.core_type = #tpu.core_type<tc>, window_params = [{transform_indices = @transform_0, window_bounds = array<i64: 8, 32>}, {transform_indices = @transform_1, window_bounds = array<i64: 8, 32>}]} {
    %c0 = arith.constant 0 : index
    %c0_0 = arith.constant 0 : index
    %0 = vector.load %arg1[%c0, %c0_0] : memref<8x32xf32, #tpu.memory_space<vmem>>, vector<8x32xf32>
    %1 = arith.mulf %0, %0 : vector<8x32xf32>
    %cst = arith.constant dense<0.000000e+00> : vector<8xf32>
    %2 = vector.multi_reduction <add>, %1, %cst [1] : vector<8x32xf32> to vector<8xf32>
    %3 = vector.shape_cast %2 : vector<8xf32> to vector<8x1xf32>
    %cst_1 = arith.constant 1.000000e-24 : f32
    %4 = vector.broadcast %cst_1 : f32 to vector<8x1xf32>
    %5 = arith.maximumf %3, %4 : vector<8x1xf32>
    %6 = math.rsqrt %5 : vector<8x1xf32>
    %7 = vector.broadcast %6 : vector<8x1xf32> to vector<8x32xf32>
    %8 = arith.mulf %0, %7 : vector<8x32xf32>
    %9 = arith.truncf %8 : vector<8x32xf32> to vector<8x32xbf16>
    %c0_2 = arith.constant 0 : index
    %c0_3 = arith.constant 0 : index
    %10 = vector.load %arg2[%c0_2, %c0_3] : memref<8x32xbf16, #tpu.memory_space<vmem>>, vector<8x32xbf16>
    tpu.vector_store %arg2[%c0_2, %c0_3], %9 {strides = array<i32>} : memref<8x32xbf16, #tpu.memory_space<vmem>>, vector<8x32xbf16>,
    return
  }
  func.func @transform_0(%arg0: i32) -> (i32, i32) {
    %c0_i32 = arith.constant 0 : i32
    %c0_i32_0 = arith.constant 0 : i32
    return %arg0, %c0_i32 : i32, i32
  }
  func.func @transform_1(%arg0: i32) -> (i32, i32) {
    %c0_i32 = arith.constant 0 : i32
    %c0_i32_0 = arith.constant 0 : i32
    return %arg0, %c0_i32 : i32, i32
  }
}

</mosaic_0001>

<llo_original>
// kernel: tpu_custom_call.1
$region0: #{tpu_custom_call.1}
  #allocation0 [shape = 'u32[]', space=smem, size = 0x4, offset = 0x4, fixed_abs, tag = 'smem constant byte address 0x4 - core index']
  #allocation1 [shape = 'u32[144,128]{1,0:T(1,128)}', space=vmem, size = 0x12000, scoped, tag = 'internal scratch']
  %s0 = inlined_call_operand.hbm [shape: f32[8,32], index: 0, kind: input, shape index: {}]
  %s1 = inlined_call_operand.hbm [shape: bf16[8,32], index: 1, kind: output, shape index: {}]
  %s2 = sld [smem:[#allocation0]]
  $region18: #{tpu_custom_call.1} parent=0
    _
  %s4 = ssub.s32 1, %s2
  %s5 = scalar_select 0, %s4, %s2
  $region1: #{tpu_custom_call.1} parent=0
    #allocation2 [shape = 'u8[4096]{0}', space=vmem, size = 0x1000, scoped, tag = 'input window, operand 0, single buffered']
    #allocation3 [shape = 's32[1]{0}', space=sflag, size = 0x4, scoped, tag = 'scoped memory for tpu_custom_call.1']
    #allocation4 [shape = 's32[1]{0}', space=sflag, size = 0x4, scoped, tag = 'scoped memory for tpu_custom_call.1']
    #allocation5 [shape = 'u8[2048]{0}', space=vmem, size = 0x800, scoped, tag = 'output window, operand 0, single buffered']
    %6 = vsyncpa [#allocation3], 0
    %7 = vsyncpa [#allocation4], 0
    // Predicated region
    $region2: #{tpu_custom_call.1} parent=1 // pred_check
      _
    $region3: #{tpu_custom_call.1} parent=1 // pred_check_branch
      %9 = sbr.rel (0) target = $region5
    $region4: #{tpu_custom_call.1} parent=1 // pred_region
      %s11 = ssub.s32 128, 128
      %12 = vsyncadd [#allocation3], %s11
      %s14 = sshll.u32 [#allocation2], 4
      %s15 = int_to_ptr.vmem [resolvable:$true] %s14
      %17 = dma.hbm_to_vmem [thread:$0]  %s0, 128, %s15, [#allocation3]
    $region5: #{tpu_custom_call.1} parent=1 // pred_fallthru
      _
    // Predicated region
    $region6: #{tpu_custom_call.1} parent=1 // pred_check
      _
    $region7: #{tpu_custom_call.1} parent=1 // pred_check_branch
      %19 = sbr.rel (0) target = $region9
    $region8: #{tpu_custom_call.1} parent=1 // pred_region
      %20 = dma.done [#allocation3], 128
    $region9: #{tpu_custom_call.1} parent=1 // pred_fallthru
      _
    %v21 = vld [vmem:[#allocation2] sm:$0xff]
    %v22 = vmul.f32 %v21, %v21
    %vm23 = vcmask 261120
    %v24 = vsel %vm23, %v22, 0.0
    %25 = vadd.xlane.f32.xlu0 %v24
    %v26 = vpop.xlane.xlu0 %25
    %v27 = vmax.f32 %v26, 1e-24
    %v28 = vrsqrt.pop %v27
    %v29 = vmul.f32 %v21, %v28
    %v30 = vpack.c.bf16 %v29, %v29
    %vm31 = vcmask 257024
    %32 = vst.msk [vmem:[#allocation5] sm:$0xf] %vm31, %v30
    // Predicated region
    $region10: #{tpu_custom_call.1} parent=1 // pred_check
      _
    $region11: #{tpu_custom_call.1} parent=1 // pred_check_branch
      %34 = sbr.rel (0) target = $region13
    $region12: #{tpu_custom_call.1} parent=1 // pred_region
      %s36 = ssub.s32 64, 64
      %37 = vsyncadd [#allocation4], %s36
      %s39 = sshll.u32 [#allocation5], 4
      %s40 = int_to_ptr.vmem [resolvable:$true] %s39
      %42 = dma.vmem_to_hbm [thread:$0]  %s40, 64, %s1, [#allocation4]
    $region13: #{tpu_custom_call.1} parent=1 // pred_fallthru
      _
    // Predicated region
    $region14: #{tpu_custom_call.1} parent=1 // pred_check
      _
    $region15: #{tpu_custom_call.1} parent=1 // pred_check_branch
      %44 = sbr.rel (0) target = $region17
    $region16: #{tpu_custom_call.1} parent=1 // pred_region
      %45 = dma.done [#allocation4], 64
    $region17: #{tpu_custom_call.1} parent=1 // pred_fallthru
      _
    %46 = vsyncpa [#allocation3], 1
    %47 = vsyncpa [#allocation4], 1

</llo_original>
